<compile_context>
chip_gen: v7x
topology: tpu7x:2x2x1
jax: 0.10.0
libtpu: 0.0.40
codegen_flags: <defaults>
</compile_context>

<pallas_src>
import functools
import math

import jax
import jax.numpy as jnp
from jax.experimental import pallas as pl
from jax.experimental.pallas import tpu as pltpu


# ------------------------------ Pallas kernel --------------------------------

def _inv_dwsep_kernel(x_ref, w1_ref, wd_ref, bias_ref, mask_ref, o_ref, *, H, W, K):
    """Fused Conv1x1 -> depthwise KxK -> BN(bias; scale pre-folded) -> ReLU.

    One image per grid step.  Channels on sublanes, flattened H*W pixels on
    lanes (lane-dense when H*W is a multiple of 128).

    x_ref:    (Cin,  L)    input image, L = H*W
    w1_ref:   (Cout, Cin)  1x1 point-wise conv weight
    wd_ref:   (Cout, K*K)  depthwise taps, BN scale already folded in
    bias_ref: (Cout, 1)    folded BN bias
    mask_ref: (K*K,  L)    per-tap boundary-validity masks (precomputed on host)
    o_ref:    (Cout, L)
    """
    L = H * W
    pad = K // 2

    # 1x1 point-wise conv on the MXU:  y[co, m] = sum_ci w1[co, ci] * x[ci, m]
    y = jnp.dot(w1_ref[...], x_ref[...], preferred_element_type=jnp.float32)  # (Cout, L) f32

    wd = wd_ref[...]          # (Cout, K*K)
    mask = mask_ref[...]      # (K*K,  L)

    # Depthwise KxK conv: each tap is a lane rotation of y by its flattened
    # offset, masked at the image boundary, scaled by the per-channel tap weight.
    acc = jnp.zeros_like(y)
    t = 0
    for di in range(-pad, pad + 1):
        for dj in range(-pad, pad + 1):
            s = di * W + dj                                   # flat lane offset of tap (di, dj)
            if s != 0:
                shifted = pltpu.roll(y, (-s) % L, axis=1)     # out[m] = y[(m + s) mod L]  (XLU)
            else:
                shifted = y
            coeff = wd[:, t:t + 1] * mask[t:t + 1, :]         # (Cout, 1) x (1, L) -> (Cout, L)
            acc = acc + shifted * coeff
            t += 1

    out = acc + bias_ref[...]                                 # BN bias (scale folded into wd)
    o_ref[...] = jnp.maximum(out, 0.0).astype(o_ref.dtype)    # ReLU


# ------------------------------- wrapper --------------------------------------

def _cost_estimate(N, Cin, Cout, L, K, act_bytes):
    flops = 2 * N * Cout * L * (Cin + K * K) + 2 * N * Cout * L
    bytes_accessed = (N * Cin * L + N * Cout * L) * act_bytes \
        + (Cout * Cin) * act_bytes \
        + (Cout * K * K + Cout + K * K * L) * 4
    return pl.CostEstimate(flops=int(flops), transcendentals=0,
                           bytes_accessed=int(bytes_accessed))


def inversed_dwsep_forward(x_nchw, params, *, kernel_size, stride=1,
                           bn_eps=1e-5, compute_dtype=jnp.float32):
    """Forward pass of InversedDepthwiseSeparable (inference-mode BatchNorm).

    x_nchw: (N, Cin, H, W) float32, PyTorch NCHW layout.
    params: dict with
        w1:    (Cout, Cin)   conv1 weight (1x1, bias=False)
        wd:    (Cout, K, K)  conv2 depthwise weight (groups=Cout, bias=False)
        gamma, beta, rmean, rvar: (Cout,) BatchNorm2d affine params / running stats
    """
    if stride != 1:
        # TODO(synk): stride > 1 depthwise conv (output subsampling) not implemented.
        raise NotImplementedError("only stride=1 is implemented")

    N, Cin, H, W = x_nchw.shape
    L = H * W
    K = kernel_size
    pad = K // 2
    Cout = params["w1"].shape[0]

    # Fold the inference-mode BN scale into the depthwise taps (exact), keep bias.
    scale = params["gamma"] / jnp.sqrt(params["rvar"] + bn_eps)
    bias = (params["beta"] - params["rmean"] * scale).reshape(Cout, 1).astype(jnp.float32)
    wd_eff = (params["wd"] * scale[:, None, None]).reshape(Cout, K * K).astype(jnp.float32)

    # Per-tap boundary-validity masks over the flattened H*W lane axis,
    # precomputed on the host (same (di, dj) order as the kernel loop).
    hh = jnp.arange(H)[:, None]
    ww = jnp.arange(W)[None, :]
    masks = []
    for di in range(-pad, pad + 1):
        for dj in range(-pad, pad + 1):
            valid = ((hh + di >= 0) & (hh + di < H) & (ww + dj >= 0) & (ww + dj < W))
            masks.append(valid.reshape(L))
    mask = jnp.stack(masks, axis=0).astype(jnp.float32)        # (K*K, L)

    # NCHW -> (N, Cin, H*W) is a free reshape (H*W already contiguous per channel).
    x_flat = x_nchw.reshape(N, Cin, L).astype(compute_dtype)
    w1 = params["w1"].astype(compute_dtype)                    # MXU operand (bf16-friendly)

    kernel = functools.partial(_inv_dwsep_kernel, H=H, W=W, K=K)
    out = pl.pallas_call(
        kernel,
        out_shape=jax.ShapeDtypeStruct((N, Cout, L), jnp.float32),
        grid=(N,),
        in_specs=[
            pl.BlockSpec((None, Cin, L), lambda n: (n, 0, 0)),   # one image per grid step
            pl.BlockSpec((Cout, Cin), lambda n: (0, 0)),
            pl.BlockSpec((Cout, K * K), lambda n: (0, 0)),
            pl.BlockSpec((Cout, 1), lambda n: (0, 0)),
            pl.BlockSpec((K * K, L), lambda n: (0, 0)),
        ],
        out_specs=pl.BlockSpec((None, Cout, L), lambda n: (n, 0, 0)),
        compiler_params=pltpu.CompilerParams(dimension_semantics=("parallel",)),
        cost_estimate=_cost_estimate(N, Cin, Cout, L, K,
                                     jnp.dtype(compute_dtype).itemsize),
    )(x_flat, w1, wd_eff, bias, mask)

    return out.reshape(N, Cout, H, W)


# ------------------------ deterministic parameter init ------------------------

def init_params(key, Cin, Cout, K):
    k = jax.random.split(key, 6)
    w1 = jax.random.normal(k[0], (Cout, Cin), jnp.float32) / math.sqrt(Cin)
    wd = jax.random.normal(k[1], (Cout, K, K), jnp.float32) / float(K)
    gamma = jax.random.uniform(k[2], (Cout,), jnp.float32, minval=0.8, maxval=1.2)
    beta = jax.random.normal(k[3], (Cout,), jnp.float32) * 0.1
    rmean = jax.random.normal(k[4], (Cout,), jnp.float32) * 0.1
    rvar = jax.random.uniform(k[5], (Cout,), jnp.float32, minval=0.5, maxval=1.5)
    return dict(w1=w1, wd=wd, gamma=gamma, beta=beta, rmean=rmean, rvar=rvar)


# ----------------------- pure-JAX reference (for checking) --------------------

def inversed_dwsep_reference(x_nchw, params, *, kernel_size, stride=1, bn_eps=1e-5):
    K = kernel_size
    pad = K // 2
    Cout = params["w1"].shape[0]
    w1 = params["w1"][:, :, None, None]                        # (Cout, Cin, 1, 1) OIHW
    wd = params["wd"][:, None, :, :]                           # (Cout, 1, K, K), groups=Cout
    y = jax.lax.conv_general_dilated(
        x_nchw, w1, window_strides=(1, 1), padding="VALID",
        dimension_numbers=("NCHW", "OIHW", "NCHW"),
        precision=jax.lax.Precision.HIGHEST)
    z = jax.lax.conv_general_dilated(
        y, wd, window_strides=(stride, stride),
        padding=[(pad, pad), (pad, pad)],
        dimension_numbers=("NCHW", "OIHW", "NCHW"),
        feature_group_count=Cout, precision=jax.lax.Precision.HIGHEST)
    scale = params["gamma"] / jnp.sqrt(params["rvar"] + bn_eps)
    bias = params["beta"] - params["rmean"] * scale
    z = z * scale[None, :, None, None] + bias[None, :, None, None]
    return jnp.maximum(z, 0.0)


# ----------------------------------- main --------------------------------------

if __name__ == "__main__":
    N, Cin, Cout, H, W, K = 2, 16, 32, 16, 16, 3   # H*W = 256 -> lane-dense stores

    key = jax.random.PRNGKey(0)
    kx, kp = jax.random.split(key)
    x = jax.random.normal(kx, (N, Cin, H, W), jnp.float32)
    params = init_params(kp, Cin, Cout, K)

    # f32 path (default)
    out = inversed_dwsep_forward(x, params, kernel_size=K, stride=1)
    out = jax.block_until_ready(out)

    ref = inversed_dwsep_reference(x, params, kernel_size=K, stride=1)
    assert out.shape == ref.shape, (out.shape, ref.shape)
    if not jnp.allclose(out, ref, atol=1e-3, rtol=1e-3):
        raise AssertionError("Pallas f32 output mismatches pure-JAX reference")

    # bf16 transfer / MXU path (f32 accumulation), looser tolerance.
    out_bf16 = jax.block_until_ready(
        inversed_dwsep_forward(x, params, kernel_size=K, stride=1,
                               compute_dtype=jnp.bfloat16))
    if not jnp.allclose(out_bf16, ref, atol=1e-1, rtol=1e-1):
        raise AssertionError("Pallas bf16 output deviates too far from reference")

    print("KERNEL_OK")
</pallas_src>

<mosaic_0001>
module attributes {stable_mosaic.version = 11 : i64} {
  func.func @_inv_dwsep_kernel(%arg0: i32, %arg1: memref<1x16x256xf32, #tpu.memory_space<vmem>>, %arg2: memref<32x16xf32, #tpu.memory_space<vmem>>, %arg3: memref<32x9xf32, #tpu.memory_space<vmem>>, %arg4: memref<32x1xf32, #tpu.memory_space<vmem>>, %arg5: memref<9x256xf32, #tpu.memory_space<vmem>>, %arg6: memref<1x32x256xf32, #tpu.memory_space<vmem>>) attributes {dimension_semantics = [#tpu.dimension_semantics<parallel>], iteration_bounds = array<i64: 2>, scalar_prefetch = 0 : i64, scratch_operands = 0 : i64, tpu.core_type = #tpu.core_type<tc>, window_params = [{transform_indices = @transform_0, window_bounds = array<i64: 1, 16, 256>}, {pipeline_mode = #tpu.pipeline_mode<synchronous>, transform_indices = @transform_1, window_bounds = array<i64: 32, 16>}, {pipeline_mode = #tpu.pipeline_mode<synchronous>, transform_indices = @transform_2, window_bounds = array<i64: 32, 9>}, {pipeline_mode = #tpu.pipeline_mode<synchronous>, transform_indices = @transform_3, window_bounds = array<i64: 32, 1>}, {pipeline_mode = #tpu.pipeline_mode<synchronous>, transform_indices = @transform_4, window_bounds = array<i64: 9, 256>}, {transform_indices = @transform_5, window_bounds = array<i64: 1, 32, 256>}]} {
    %c0 = arith.constant 0 : index
    %c0_0 = arith.constant 0 : index
    %0 = vector.load %arg2[%c0, %c0_0] : memref<32x16xf32, #tpu.memory_space<vmem>>, vector<32x16xf32>
    %c0_1 = arith.constant 0 : index
    %c0_2 = arith.constant 0 : index
    %c0_3 = arith.constant 0 : index
    %1 = vector.load %arg1[%c0_1, %c0_2, %c0_3] : memref<1x16x256xf32, #tpu.memory_space<vmem>>, vector<1x16x256xf32>
    %2 = vector.shape_cast %1 : vector<1x16x256xf32> to vector<16x256xf32>
    %cst = arith.constant dense<0.000000e+00> : vector<32x256xf32>
    %3 = tpu.matmul %0, %2, %cst {dimension_numbers = #tpu.dot_dimension_numbers<[1], [0], [0], [1], [0, 0, 1, 1], [], []>} : vector<32x16xf32>, vector<16x256xf32>, vector<32x256xf32> -> vector<32x256xf32>
    %c0_4 = arith.constant 0 : index
    %c0_5 = arith.constant 0 : index
    %4 = vector.load %arg3[%c0_4, %c0_5] : memref<32x9xf32, #tpu.memory_space<vmem>>, vector<32x9xf32>
    %c0_6 = arith.constant 0 : index
    %c0_7 = arith.constant 0 : index
    %5 = vector.load %arg5[%c0_6, %c0_7] : memref<9x256xf32, #tpu.memory_space<vmem>>, vector<9x256xf32>
    %cst_8 = arith.constant 0.000000e+00 : f32
    %6 = vector.broadcast %cst_8 : f32 to vector<32x256xf32>
    %c17_i32 = arith.constant 17 : i32
    %7 = tpu.dynamic_rotate %3 by %c17_i32 dim 1 : vector<32x256xf32>, i32 -> vector<32x256xf32>
    %8 = vector.extract_strided_slice %4 {offsets = [0, 0], sizes = [32, 1], strides = [1, 1]} : vector<32x9xf32> to vector<32x1xf32>
    %9 = vector.extract_strided_slice %5 {offsets = [0, 0], sizes = [1, 256], strides = [1, 1]} : vector<9x256xf32> to vector<1x256xf32>
    %10 = vector.broadcast %8 : vector<32x1xf32> to vector<32x256xf32>
    %11 = vector.broadcast %9 : vector<1x256xf32> to vector<32x256xf32>
    %12 = arith.mulf %10, %11 : vector<32x256xf32>
    %13 = arith.mulf %7, %12 : vector<32x256xf32>
    %14 = arith.addf %6, %13 : vector<32x256xf32>
    %c16_i32 = arith.constant 16 : i32
    %15 = tpu.dynamic_rotate %3 by %c16_i32 dim 1 : vector<32x256xf32>, i32 -> vector<32x256xf32>
    %16 = vector.extract_strided_slice %4 {offsets = [0, 1], sizes = [32, 1], strides = [1, 1]} : vector<32x9xf32> to vector<32x1xf32>
    %17 = vector.extract_strided_slice %5 {offsets = [1, 0], sizes = [1, 256], strides = [1, 1]} : vector<9x256xf32> to vector<1x256xf32>
    %18 = vector.broadcast %16 : vector<32x1xf32> to vector<32x256xf32>
    %19 = vector.broadcast %17 : vector<1x256xf32> to vector<32x256xf32>
    %20 = arith.mulf %18, %19 : vector<32x256xf32>
    %21 = arith.mulf %15, %20 : vector<32x256xf32>
    %22 = arith.addf %14, %21 : vector<32x256xf32>
    %c15_i32 = arith.constant 15 : i32
    %23 = tpu.dynamic_rotate %3 by %c15_i32 dim 1 : vector<32x256xf32>, i32 -> vector<32x256xf32>
    %24 = vector.extract_strided_slice %4 {offsets = [0, 2], sizes = [32, 1], strides = [1, 1]} : vector<32x9xf32> to vector<32x1xf32>
    %25 = vector.extract_strided_slice %5 {offsets = [2, 0], sizes = [1, 256], strides = [1, 1]} : vector<9x256xf32> to vector<1x256xf32>
    %26 = vector.broadcast %24 : vector<32x1xf32> to vector<32x256xf32>
    %27 = vector.broadcast %25 : vector<1x256xf32> to vector<32x256xf32>
    %28 = arith.mulf %26, %27 : vector<32x256xf32>
    %29 = arith.mulf %23, %28 : vector<32x256xf32>
    %30 = arith.addf %22, %29 : vector<32x256xf32>
    %c1_i32 = arith.constant 1 : i32
    %31 = tpu.dynamic_rotate %3 by %c1_i32 dim 1 : vector<32x256xf32>, i32 -> vector<32x256xf32>
    %32 = vector.extract_strided_slice %4 {offsets = [0, 3], sizes = [32, 1], strides = [1, 1]} : vector<32x9xf32> to vector<32x1xf32>
    %33 = vector.extract_strided_slice %5 {offsets = [3, 0], sizes = [1, 256], strides = [1, 1]} : vector<9x256xf32> to vector<1x256xf32>
    %34 = vector.broadcast %32 : vector<32x1xf32> to vector<32x256xf32>
    %35 = vector.broadcast %33 : vector<1x256xf32> to vector<32x256xf32>
    %36 = arith.mulf %34, %35 : vector<32x256xf32>
    %37 = arith.mulf %31, %36 : vector<32x256xf32>
    %38 = arith.addf %30, %37 : vector<32x256xf32>
    %39 = vector.extract_strided_slice %4 {offsets = [0, 4], sizes = [32, 1], strides = [1, 1]} : vector<32x9xf32> to vector<32x1xf32>
    %40 = vector.extract_strided_slice %5 {offsets = [4, 0], sizes = [1, 256], strides = [1, 1]} : vector<9x256xf32> to vector<1x256xf32>
    %41 = vector.broadcast %39 : vector<32x1xf32> to vector<32x256xf32>
    %42 = vector.broadcast %40 : vector<1x256xf32> to vector<32x256xf32>
    %43 = arith.mulf %41, %42 : vector<32x256xf32>
    %44 = arith.mulf %3, %43 : vector<32x256xf32>
    %45 = arith.addf %38, %44 : vector<32x256xf32>
    %c255_i32 = arith.constant 255 : i32
    %46 = tpu.dynamic_rotate %3 by %c255_i32 dim 1 : vector<32x256xf32>, i32 -> vector<32x256xf32>
    %47 = vector.extract_strided_slice %4 {offsets = [0, 5], sizes = [32, 1], strides = [1, 1]} : vector<32x9xf32> to vector<32x1xf32>
    %48 = vector.extract_strided_slice %5 {offsets = [5, 0], sizes = [1, 256], strides = [1, 1]} : vector<9x256xf32> to vector<1x256xf32>
    %49 = vector.broadcast %47 : vector<32x1xf32> to vector<32x256xf32>
    %50 = vector.broadcast %48 : vector<1x256xf32> to vector<32x256xf32>
    %51 = arith.mulf %49, %50 : vector<32x256xf32>
    %52 = arith.mulf %46, %51 : vector<32x256xf32>
    %53 = arith.addf %45, %52 : vector<32x256xf32>
    %c241_i32 = arith.constant 241 : i32
    %54 = tpu.dynamic_rotate %3 by %c241_i32 dim 1 : vector<32x256xf32>, i32 -> vector<32x256xf32>
    %55 = vector.extract_strided_slice %4 {offsets = [0, 6], sizes = [32, 1], strides = [1, 1]} : vector<32x9xf32> to vector<32x1xf32>
    %56 = vector.extract_strided_slice %5 {offsets = [6, 0], sizes = [1, 256], strides = [1, 1]} : vector<9x256xf32> to vector<1x256xf32>
    %57 = vector.broadcast %55 : vector<32x1xf32> to vector<32x256xf32>
    %58 = vector.broadcast %56 : vector<1x256xf32> to vector<32x256xf32>
    %59 = arith.mulf %57, %58 : vector<32x256xf32>
    %60 = arith.mulf %54, %59 : vector<32x256xf32>
    %61 = arith.addf %53, %60 : vector<32x256xf32>
    %c240_i32 = arith.constant 240 : i32
    %62 = tpu.dynamic_rotate %3 by %c240_i32 dim 1 : vector<32x256xf32>, i32 -> vector<32x256xf32>
    %63 = vector.extract_strided_slice %4 {offsets = [0, 7], sizes = [32, 1], strides = [1, 1]} : vector<32x9xf32> to vector<32x1xf32>
    %64 = vector.extract_strided_slice %5 {offsets = [7, 0], sizes = [1, 256], strides = [1, 1]} : vector<9x256xf32> to vector<1x256xf32>
    %65 = vector.broadcast %63 : vector<32x1xf32> to vector<32x256xf32>
    %66 = vector.broadcast %64 : vector<1x256xf32> to vector<32x256xf32>
    %67 = arith.mulf %65, %66 : vector<32x256xf32>
    %68 = arith.mulf %62, %67 : vector<32x256xf32>
    %69 = arith.addf %61, %68 : vector<32x256xf32>
    %c239_i32 = arith.constant 239 : i32
    %70 = tpu.dynamic_rotate %3 by %c239_i32 dim 1 : vector<32x256xf32>, i32 -> vector<32x256xf32>
    %71 = vector.extract_strided_slice %4 {offsets = [0, 8], sizes = [32, 1], strides = [1, 1]} : vector<32x9xf32> to vector<32x1xf32>
    %72 = vector.extract_strided_slice %5 {offsets = [8, 0], sizes = [1, 256], strides = [1, 1]} : vector<9x256xf32> to vector<1x256xf32>
    %73 = vector.broadcast %71 : vector<32x1xf32> to vector<32x256xf32>
    %74 = vector.broadcast %72 : vector<1x256xf32> to vector<32x256xf32>
    %75 = arith.mulf %73, %74 : vector<32x256xf32>
    %76 = arith.mulf %70, %75 : vector<32x256xf32>
    %77 = arith.addf %69, %76 : vector<32x256xf32>
    %c0_9 = arith.constant 0 : index
    %c0_10 = arith.constant 0 : index
    %78 = vector.load %arg4[%c0_9, %c0_10] : memref<32x1xf32, #tpu.memory_space<vmem>>, vector<32x1xf32>
    %79 = vector.broadcast %78 : vector<32x1xf32> to vector<32x256xf32>
    %80 = arith.addf %77, %79 : vector<32x256xf32>
    %cst_11 = arith.constant 0.000000e+00 : f32
    %81 = vector.broadcast %cst_11 : f32 to vector<32x256xf32>
    %82 = arith.maximumf %80, %81 : vector<32x256xf32>
    %c0_12 = arith.constant 0 : index
    %c0_13 = arith.constant 0 : index
    %c0_14 = arith.constant 0 : index
    %83 = vector.load %arg6[%c0_12, %c0_13, %c0_14] : memref<1x32x256xf32, #tpu.memory_space<vmem>>, vector<1x32x256xf32>
    %84 = vector.shape_cast %83 : vector<1x32x256xf32> to vector<32x256xf32>
    %85 = vector.shape_cast %82 : vector<32x256xf32> to vector<1x32x256xf32>
    tpu.vector_store %arg6[%c0_12, %c0_13, %c0_14], %85 {strides = array<i32>} : memref<1x32x256xf32, #tpu.memory_space<vmem>>, vector<1x32x256xf32>,
    return
  }
  func.func @transform_0(%arg0: i32) -> (i32, i32, i32) {
    %c0_i32 = arith.constant 0 : i32
    %c0_i32_0 = arith.constant 0 : i32
    %c0_i32_1 = arith.constant 0 : i32
    return %arg0, %c0_i32, %c0_i32_0 : i32, i32, i32
  }
  func.func @transform_1(%arg0: i32) -> (i32, i32) {
    %c0_i32 = arith.constant 0 : i32
    %c0_i32_0 = arith.constant 0 : i32
    %c0_i32_1 = arith.constant 0 : i32
    return %c0_i32, %c0_i32_0 : i32, i32
  }
  func.func @transform_2(%arg0: i32) -> (i32, i32) {
    %c0_i32 = arith.constant 0 : i32
    %c0_i32_0 = arith.constant 0 : i32
    %c0_i32_1 = arith.constant 0 : i32
    return %c0_i32, %c0_i32_0 : i32, i32
  }
  func.func @transform_3(%arg0: i32) -> (i32, i32) {
    %c0_i32 = arith.constant 0 : i32
    %c0_i32_0 = arith.constant 0 : i32
    %c0_i32_1 = arith.constant 0 : i32
    return %c0_i32, %c0_i32_0 : i32, i32
  }
  func.func @transform_4(%arg0: i32) -> (i32, i32) {
    %c0_i32 = arith.constant 0 : i32
    %c0_i32_0 = arith.constant 0 : i32
    %c0_i32_1 = arith.constant 0 : i32
    return %c0_i32, %c0_i32_0 : i32, i32
  }
  func.func @transform_5(%arg0: i32) -> (i32, i32, i32) {
    %c0_i32 = arith.constant 0 : i32
    %c0_i32_0 = arith.constant 0 : i32
    %c0_i32_1 = arith.constant 0 : i32
    return %arg0, %c0_i32, %c0_i32_0 : i32, i32, i32
  }
}

</mosaic_0001>

<llo_original>
// kernel: tpu_custom_call.1
$region0: #{tpu_custom_call.1}
  #allocation0 [shape = 'u32[]', space=smem, size = 0x4, offset = 0x4, fixed_abs, tag = 'smem constant byte address 0x4 - core index']
  #allocation1 [shape = 'u32[144,128]{1,0:T(1,128)}', space=vmem, size = 0x12000, scoped, tag = 'internal scratch']
  %s0 = inlined_call_operand.vmem [shape: f32[2,16,256], index: 0, kind: input, shape index: {}]
  %s1 = inlined_call_operand.vmem [shape: f32[32,16], index: 1, kind: input, shape index: {}]
  %s2 = inlined_call_operand.vmem [shape: f32[32,9], index: 2, kind: input, shape index: {}]
  %s3 = inlined_call_operand.vmem [shape: f32[32,1], index: 3, kind: input, shape index: {}]
  %s4 = inlined_call_operand.vmem [shape: f32[9,256], index: 4, kind: input, shape index: {}]
  %s5 = inlined_call_operand.hbm [shape: f32[2,32,256], index: 5, kind: output, shape index: {}]
  %s6 = sld [smem:[#allocation0]]
  $region53: #{tpu_custom_call.1} parent=0
    _
  %s8 = ssub.s32 1, %s6
  %s9 = scalar_select 0, %s8, %s6
  $region1: #{tpu_custom_call.1} parent=0
    #allocation2 [shape = 'u8[65536]{0}', space=vmem, size = 0x10000, scoped, tag = 'output window, operand 0']
    #allocation3 [shape = 's32[2]{0}', space=sflag, size = 0x8, scoped, tag = 'scoped memory for tpu_custom_call.1']
    %10 = vsyncpa [#allocation3], 0
    %s11 = scalar_lea.sflag [#allocation3], 1
    %12 = vsyncpa %s11, 0
    loop: start=0, step=1, limit=4
    $region2: #{tpu_custom_call.1} parent=1 // loop_pre_header
      _
    $region3: #{tpu_custom_call.1} parent=1 // loop_header
      %s14 = sphi 0, %s18
      %p15 = scmp.ge.s32.totalorder %s14, 4
      %s24 = sphi 0, %s26
      %s27 = sphi 0, %s24
      %s28 = sphi 0, %s27
      %s44 = sphi 0, %s28
      %s48 = sphi 0, %s48
      %s50 = sphi 0, %s48
      %s51 = sphi 0, %s50
      %s65 = sphi 0, %s51
      %s69 = sphi 0, %s69
      %s71 = sphi 0, %s69
      %s72 = sphi 0, %s71
      %s86 = sphi 0, %s72
      %s90 = sphi 0, %s90
      %s92 = sphi 0, %s90
      %s93 = sphi 0, %s92
      %s107 = sphi 0, %s93
      %s111 = sphi 0, %s111
      %s113 = sphi 0, %s111
      %s114 = sphi 0, %s113
      %s128 = sphi 0, %s114
      %s134 = sphi 0, %s136
      %s137 = sphi 0, %s134
      %s138 = sphi 0, %s137
      %s154 = sphi 0, %s138
    $region4: #{tpu_custom_call.1} parent=1 // loop_header_branch
      %17 = sbr.rel (%p15) target = $region8
    $region5: #{tpu_custom_call.1} parent=1 // loop_body
      %s19 = ssub.s32 %s14, 1
      %s20 = ssub.s32 %s14, 2
      %s21 = sadd.s32 %s14, 1
      %s22 = ssub.s32 %s14, %s21
      %p23 = scmp.eq.s32.totalorder %s22, 0
      %s25 = sadd.s32 %s24, 1
      %s26 = scalar_select %p23, %s24, %s25
      %p29 = pneg %p23
      %p30 = scmp.eq.s32.totalorder %s14, 1
      %p31 = por %p29, %p30
      %p32 = scmp.ne.s32.totalorder %s24, %s27
      %p33 = scmp.eq.s32.totalorder %s14, 0
      %p34 = por %p32, %p33
      %p35 = scmp.ne.s32.totalorder %s24, %s27
      %p36 = scmp.eq.s32.totalorder %s19, 1
      %p37 = por %p35, %p36
      %p38 = scmp.ne.s32.totalorder %s27, %s28
      %p39 = scmp.eq.s32.totalorder %s19, 0
      %p40 = por %p38, %p39
      %p41 = scmp.ne.s32.totalorder %s27, %s28
      %p42 = scmp.eq.s32.totalorder %s20, 1
      %p43 = por %p41, %p42
      %p45 = scmp.ne.s32.totalorder %s28, %s44
      %p46 = scmp.eq.s32.totalorder %s20, 0
      %p47 = por %p45, %p46
      %s49 = sadd.s32 %s48, 1
      %p52 = scmp.eq.s32.totalorder %s14, 1
      %p53 = scmp.ne.s32.totalorder %s48, %s50
      %p54 = scmp.eq.s32.totalorder %s14, 0
      %p55 = por %p53, %p54
      %p56 = scmp.ne.s32.totalorder %s48, %s50
      %p57 = scmp.eq.s32.totalorder %s19, 1
      %p58 = por %p56, %p57
      %p59 = scmp.ne.s32.totalorder %s50, %s51
      %p60 = scmp.eq.s32.totalorder %s19, 0
      %p61 = por %p59, %p60
      %p62 = scmp.ne.s32.totalorder %s50, %s51
      %p63 = scmp.eq.s32.totalorder %s20, 1
      %p64 = por %p62, %p63
      %p66 = scmp.ne.s32.totalorder %s51, %s65
      %p67 = scmp.eq.s32.totalorder %s20, 0
      %p68 = por %p66, %p67
      %s70 = sadd.s32 %s69, 1
      %p73 = scmp.eq.s32.totalorder %s14, 1
      %p74 = scmp.ne.s32.totalorder %s69, %s71
      %p75 = scmp.eq.s32.totalorder %s14, 0
      %p76 = por %p74, %p75
      %p77 = scmp.ne.s32.totalorder %s69, %s71
      %p78 = scmp.eq.s32.totalorder %s19, 1
      %p79 = por %p77, %p78
      %p80 = scmp.ne.s32.totalorder %s71, %s72
      %p81 = scmp.eq.s32.totalorder %s19, 0
      %p82 = por %p80, %p81
      %p83 = scmp.ne.s32.totalorder %s71, %s72
      %p84 = scmp.eq.s32.totalorder %s20, 1
      %p85 = por %p83, %p84
      %p87 = scmp.ne.s32.totalorder %s72, %s86
      %p88 = scmp.eq.s32.totalorder %s20, 0
      %p89 = por %p87, %p88
      %s91 = sadd.s32 %s90, 1
      %p94 = scmp.eq.s32.totalorder %s14, 1
      %p95 = scmp.ne.s32.totalorder %s90, %s92
      %p96 = scmp.eq.s32.totalorder %s14, 0
      %p97 = por %p95, %p96
      %p98 = scmp.ne.s32.totalorder %s90, %s92
      %p99 = scmp.eq.s32.totalorder %s19, 1
      %p100 = por %p98, %p99
      %p101 = scmp.ne.s32.totalorder %s92, %s93
      %p102 = scmp.eq.s32.totalorder %s19, 0
      %p103 = por %p101, %p102
      %p104 = scmp.ne.s32.totalorder %s92, %s93
      %p105 = scmp.eq.s32.totalorder %s20, 1
      %p106 = por %p104, %p105
      %p108 = scmp.ne.s32.totalorder %s93, %s107
      %p109 = scmp.eq.s32.totalorder %s20, 0
      %p110 = por %p108, %p109
      %s112 = sadd.s32 %s111, 1
      %p115 = scmp.eq.s32.totalorder %s14, 1
      %p116 = scmp.ne.s32.totalorder %s111, %s113
      %p117 = scmp.eq.s32.totalorder %s14, 0
      %p118 = por %p116, %p117
      %p119 = scmp.ne.s32.totalorder %s111, %s113
      %p120 = scmp.eq.s32.totalorder %s19, 1
      %p121 = por %p119, %p120
      %p122 = scmp.ne.s32.totalorder %s113, %s114
      %p123 = scmp.eq.s32.totalorder %s19, 0
      %p124 = por %p122, %p123
      %p125 = scmp.ne.s32.totalorder %s113, %s114
      %p126 = scmp.eq.s32.totalorder %s20, 1
      %p127 = por %p125, %p126
      %p129 = scmp.ne.s32.totalorder %s114, %s128
      %p130 = scmp.eq.s32.totalorder %s20, 0
      %p131 = por %p129, %p130
      %s132 = ssub.s32 %s14, %s21
      %p133 = scmp.eq.s32.totalorder %s132, 0
      %s135 = sadd.s32 %s134, 1
      %s136 = scalar_select %p133, %s134, %s135
      %p139 = pneg %p133
      %p140 = scmp.eq.s32.totalorder %s14, 1
      %p141 = por %p139, %p140
      %p142 = scmp.ne.s32.totalorder %s134, %s137
      %p143 = scmp.eq.s32.totalorder %s14, 0
      %p144 = por %p142, %p143
      %p145 = scmp.ne.s32.totalorder %s134, %s137
      %p146 = scmp.eq.s32.totalorder %s19, 1
      %p147 = por %p145, %p146
      %p148 = scmp.ne.s32.totalorder %s137, %s138
      %p149 = scmp.eq.s32.totalorder %s19, 0
      %p150 = por %p148, %p149
      %p151 = scmp.ne.s32.totalorder %s137, %s138
      %p152 = scmp.eq.s32.totalorder %s20, 1
      %p153 = por %p151, %p152
      %p155 = scmp.ne.s32.totalorder %s138, %s154
      %p156 = scmp.eq.s32.totalorder %s20, 0
      %p157 = por %p155, %p156
      %p158 = scmp.le.s32.totalorder 1, %s14
      %p159 = scmp.lt.s32.totalorder %s14, 3
      %p160 = pnand %p158, %p159
      %p161 = pneg %p160
      // Predicated region
      $region9: #{tpu_custom_call.1} parent=5 // pred_check
        _
      $region10: #{tpu_custom_call.1} parent=5 // pred_check_branch
        %163 = sbr.rel (%p160) target = $region12
      $region11: #{tpu_custom_call.1} parent=5 // pred_region
        %s164 = ssub.s32 %s14, 1
        // Predicated region
        $region13: #{tpu_custom_call.1} parent=11 // pred_check
          %p165 = pneg %p61
        $region14: #{tpu_custom_call.1} parent=11 // pred_check_branch
          %167 = sbr.rel (%p165) target = $region16
        $region15: #{tpu_custom_call.1} parent=11 // pred_region
          _
        $region16: #{tpu_custom_call.1} parent=11 // pred_fallthru
          _
        // Predicated region
        $region17: #{tpu_custom_call.1} parent=11 // pred_check
          %p168 = pneg %p82
        $region18: #{tpu_custom_call.1} parent=11 // pred_check_branch
          %170 = sbr.rel (%p168) target = $region20
        $region19: #{tpu_custom_call.1} parent=11 // pred_region
          _
        $region20: #{tpu_custom_call.1} parent=11 // pred_fallthru
          _
        // Predicated region
        $region21: #{tpu_custom_call.1} parent=11 // pred_check
          %p171 = pneg %p103
        $region22: #{tpu_custom_call.1} parent=11 // pred_check_branch
          %173 = sbr.rel (%p171) target = $region24
        $region23: #{tpu_custom_call.1} parent=11 // pred_region
          _
        $region24: #{tpu_custom_call.1} parent=11 // pred_fallthru
          _
        // Predicated region
        $region25: #{tpu_custom_call.1} parent=11 // pred_check
          %p174 = pneg %p124
        $region26: #{tpu_custom_call.1} parent=11 // pred_check_branch
          %176 = sbr.rel (%p174) target = $region28
        $region27: #{tpu_custom_call.1} parent=11 // pred_region
          _
        $region28: #{tpu_custom_call.1} parent=11 // pred_fallthru
          _
      $region12: #{tpu_custom_call.1} parent=5 // pred_fallthru
        _
      %p177 = scmp.lt.s32.totalorder %s14, 2
      // Predicated region
      $region29: #{tpu_custom_call.1} parent=5 // pred_check
        %p178 = pneg %p177
      $region30: #{tpu_custom_call.1} parent=5 // pred_check_branch
        %180 = sbr.rel (%p178) target = $region32
      $region31: #{tpu_custom_call.1} parent=5 // pred_region
        // Predicated region
        $region33: #{tpu_custom_call.1} parent=31 // pred_check
          %p181 = pneg %p34
        $region34: #{tpu_custom_call.1} parent=31 // pred_check_branch
          %183 = sbr.rel (%p181) target = $region36
        $region35: #{tpu_custom_call.1} parent=31 // pred_region
          %p184 = scmp.lt.s32.totalorder %s14, 1
          %s185 = scalar_select %p184, %s14, 1
          %s186 = smul.addr %s185, 4
          %s187 = smul.addr %s186, 8
          %s188 = scalar_lea.vmem %s0, %s187
        $region36: #{tpu_custom_call.1} parent=31 // pred_fallthru
          _
      $region32: #{tpu_custom_call.1} parent=5 // pred_fallthru
        _
      %p189 = scmp.le.s32.totalorder 1, %s14
      %p190 = scmp.lt.s32.totalorder %s14, 3
      %p191 = pnand %p189, %p190
      %p192 = pneg %p191
      // Predicated region
      $region37: #{tpu_custom_call.1} parent=5 // pred_check
        _
      $region38: #{tpu_custom_call.1} parent=5 // pred_check_branch
        %194 = sbr.rel (%p191) target = $region40
      $region39: #{tpu_custom_call.1} parent=5 // pred_region
        %s195 = ssub.s32 %s14, 1
        %p196 = scmp.lt.s32.totalorder %s19, 1
        %s197 = scalar_select %p196, %s19, 1
        %s198 = smul.addr %s197, 4
        %s199 = smul.addr %s198, 8
        %s200 = scalar_lea.vmem %s0, %s199
        %p201 = pneg %p40
        %p202 = pneg %p37
        %p203 = pneg %p61
        %p204 = pneg %p58
        %p205 = pneg %p82
        %p206 = pneg %p79
        %p207 = pneg %p103
        %p208 = pneg %p100
        %p209 = pneg %p124
        %p210 = pneg %p121
        %p211 = pneg %p150
        %p212 = pneg %p147
        %s213 = sand.u32 %s137, 1
        %s214 = scalar_lea.sflag [#allocation3], %s213
        %s215 = sand.u32 %s137, 1
        %s216 = smul.addr %s215, 64
        %s217 = scalar_lea.vmem [#allocation2], %s216
        %p218 = scmp.lt.s32.totalorder %s19, 1
        %s219 = scalar_select %p218, %s19, 1
        %s220 = smul.addr %s219, 4
        %s221 = smul.addr %s220, 8
        %s222 = scalar_lea.vmem %s0, %s221
        %v223 = vld [vmem:[%s1] sm:$0xff]
        %v224 = vld [vmem:[%s1 + $0x8] sm:$0xff]
        %v225 = vld [vmem:[%s1 + $0x10] sm:$0xff]
        %v226 = vld [vmem:[%s1 + $0x18] sm:$0xff]
        %v227 = vld [vmem:[%s222] sm:$0xff]
        %v228 = vld [vmem:[%s222 + $0x8] sm:$0xff]
        %v229 = vld [vmem:[%s222 + $0x10] sm:$0xff]
        %v230 = vld [vmem:[%s222 + $0x18] sm:$0xff]
        %vm231 = vcmask 130048
        %v233 = vsel %vm231, %v223, 0
        %v236 = vsel %vm231, %v224, 0
        %v239 = vsel %vm231, %v225, 0
        %v242 = vsel %vm231, %v226, 0
        %244 = vmatprep.subr.mxu0 %v228
        %245 = vmatpush1.msra.mxu0 %v227
        %246 = vmatprep.subr.mxu0 %v230
        %247 = vmatpush1.msra.mxu0 %v229
        %248 = vmatprep.subr.mxu0 0.0
        %249 = vmatpush1.msra.mxu0 0.0
        %250 = vmatprep.subr.mxu0 0.0
        %251 = vmatpush1.msra.mxu0 0.0
        %252 = vmatprep.subr.mxu0 0.0
        %253 = vmatpush1.msra.mxu0 0.0
        %254 = vmatprep.subr.mxu0 0.0
        %255 = vmatpush1.msra.mxu0 0.0
        %256 = vmatprep.subr.mxu0 0.0
        %257 = vmatpush1.msra.mxu0 0.0
        %258 = vmatprep.subr.mxu0 0.0
        %259 = vmatpush1.msra.mxu0 0.0
        %260 = vmatprep.subr.mxu0 0.0
        %261 = vmatpush1.msra.mxu0 0.0
        %262 = vmatprep.subr.mxu0 0.0
        %263 = vmatpush1.msra.mxu0 0.0
        %264 = vmatprep.subr.mxu0 0.0
        %265 = vmatpush1.msra.mxu0 0.0
        %266 = vmatprep.subr.mxu0 0.0
        %267 = vmatpush1.msra.mxu0 0.0
        %268 = vmatprep.subr.mxu0 0.0
        %269 = vmatpush1.msra.mxu0 0.0
        %270 = vmatprep.subr.mxu0 0.0
        %271 = vmatpush1.msra.mxu0 0.0
        %272 = vmatprep.subr.mxu0 0.0
        %273 = vmatpush1.msra.mxu0 0.0
        %274 = vmatprep.subr.mxu0 0.0
        %275 = vmatpush1.msra.mxu0 0.0
        %276 = vmatprep.subr.mxu0 0.0
        %277 = vmatpush1.msra.mxu0 0.0
        %278 = vmatprep.subr.mxu0 0.0
        %279 = vmatpush1.msra.mxu0 0.0
        %280 = vmatprep.subr.mxu0 0.0
        %281 = vmatpush1.msra.mxu0 0.0
        %282 = vmatprep.subr.mxu0 0.0
        %283 = vmatpush1.msra.mxu0 0.0
        %284 = vmatprep.subr.mxu0 0.0
        %285 = vmatpush1.msra.mxu0 0.0
        %286 = vmatprep.subr.mxu0 0.0
        %287 = vmatpush1.msra.mxu0 0.0
        %288 = vmatprep.subr.mxu0 0.0
        %289 = vmatpush1.msra.mxu0 0.0
        %290 = vmatprep.subr.mxu0 0.0
        %291 = vmatpush1.msra.mxu0 0.0
        %292 = vmatprep.subr.mxu0 0.0
        %293 = vmatpush1.msra.mxu0 0.0
        %294 = vmatprep.subr.mxu0 0.0
        %295 = vmatpush1.msra.mxu0 0.0
        %296 = vmatprep.subr.mxu0 0.0
        %297 = vmatpush1.msra.mxu0 0.0
        %298 = vmatprep.subr.mxu0 0.0
        %299 = vmatpush1.msra.mxu0 0.0
        %300 = vmatprep.subr.mxu0 0.0
        %301 = vmatpush1.msra.mxu0 0.0
        %302 = vmatprep.subr.mxu0 0.0
        %303 = vmatpush1.msra.mxu0 0.0
        %304 = vmatprep.subr.mxu0 0.0
        %305 = vmatpush1.msra.mxu0 0.0
        %306 = vmatprep.subr.mxu0 0.0
        %307 = vmatpush1.msra.mxu0 0.0
        %308 = vmatprep.mubr.f32.mxu0 0.0
        %309 = vmatmul.mubr.f32.gmra.mrb[0].mxu0 %v233
        %v310 = vpop.f32.mrb[0].mxu0
        %v311 = vadd.f32 0.0, %v310
        %v312 = vpop.f32.mrb[0].mxu0
        %v313 = vadd.f32 0.0, %v312
        %314 = vmatprep.mubr.f32.mxu0 0.0
        %315 = vmatmul.mubr.f32.gmra.mrb[0].mxu0 %v236
        %v316 = vpop.f32.mrb[0].mxu0
        %v317 = vadd.f32 0.0, %v316
        %v318 = vpop.f32.mrb[0].mxu0
        %v319 = vadd.f32 0.0, %v318
        %320 = vmatprep.mubr.f32.mxu0 0.0
        %321 = vmatmul.mubr.f32.gmra.mrb[0].mxu0 %v239
        %v322 = vpop.f32.mrb[0].mxu0
        %v323 = vadd.f32 0.0, %v322
        %v324 = vpop.f32.mrb[0].mxu0
        %v325 = vadd.f32 0.0, %v324
        %326 = vmatprep.mubr.f32.mxu0 0.0
        %327 = vmatmul.mubr.f32.gmra.mrb[0].mxu0 %v242
        %v328 = vpop.f32.mrb[0].mxu0
        %v329 = vadd.f32 0.0, %v328
        %v330 = vpop.f32.mrb[0].mxu0
        %v331 = vadd.f32 0.0, %v330
        %332 = vdwg.mxu0
        %v333 = vld [vmem:[%s2] sm:$0xff]
        %v334 = vld [vmem:[%s2 + $0x8] sm:$0xff]
        %v335 = vld [vmem:[%s2 + $0x10] sm:$0xff]
        %v336 = vld [vmem:[%s2 + $0x18] sm:$0xff]
        %v337 = vld [vmem:[%s4] sm:$0xff]
        %v338 = vld [vmem:[%s4 + $0x8] sm:$0xff]
        %v339 = vld [vmem:[%s4 + $0x10] sm:$0x1]
        %v340 = vld [vmem:[%s4 + $0x18] sm:$0x1]
        %341 = vrot.lane.b32.xlu0 %v311, 17
        %v342 = vpop.permute.xlu0 %341
        %343 = vrot.lane.b32.xlu0 %v317, 17
        %v344 = vpop.permute.xlu0 %343
        %345 = vrot.lane.b32.xlu0 %v323, 17
        %v346 = vpop.permute.xlu0 %345
        %347 = vrot.lane.b32.xlu0 %v329, 17
        %v348 = vpop.permute.xlu0 %347
        %349 = vrot.lane.b32.xlu0 %v313, 17
        %v350 = vpop.permute.xlu0 %349
        %351 = vrot.lane.b32.xlu0 %v319, 17
        %v352 = vpop.permute.xlu0 %351
        %353 = vrot.lane.b32.xlu0 %v325, 17
        %v354 = vpop.permute.xlu0 %353
        %355 = vrot.lane.b32.xlu0 %v331, 17
        %v356 = vpop.permute.xlu0 %355
        %v357 = vlaneseq
        %v358 = vand.u32 %v357, 127
        %vm359 = vcmp.lt.s32.totalorder %v358, 17
        %v360 = vsel %vm359, %v342, %v350
        %v361 = vsel %vm359, %v344, %v352
        %v362 = vsel %vm359, %v346, %v354
        %v363 = vsel %vm359, %v348, %v356
        %v364 = vsel %vm359, %v350, %v342
        %v365 = vsel %vm359, %v352, %v344
        %v366 = vsel %vm359, %v354, %v346
        %v367 = vsel %vm359, %v356, %v348
        %369 = vset.pattern.permute.xlu0 0
        %370 = vperm.xlu0 %369, %v333
        %v371 = vpop.permute.xlu0 %370
        %374 = vset.pattern.permute.xlu0 0
        %375 = vperm.xlu0 %374, %v334
        %v376 = vpop.permute.xlu0 %375
        %379 = vset.pattern.permute.xlu0 0
        %380 = vperm.xlu0 %379, %v335
        %v381 = vpop.permute.xlu0 %380
        %384 = vset.pattern.permute.xlu0 0
        %385 = vperm.xlu0 %384, %v336
        %v386 = vpop.permute.xlu0 %385
        %v388 = vlaneseq
        %v389 = vshrl.u32 %v388, 7
        %v390 = vsub.s32 0, %v389
        %v391 = vrot.slane %v337, %v390
        %v392 = vlaneseq
        %v393 = vshrl.u32 %v392, 7
        %v394 = vsub.s32 0, %v393
        %v395 = vrot.slane %v338, %v394
        %v396 = vmul.f32 %v371, %v391
        %v397 = vmul.f32 %v371, %v395
        %v398 = vmul.f32 %v376, %v391
        %v399 = vmul.f32 %v376, %v395
        %v400 = vmul.f32 %v381, %v391
        %v401 = vmul.f32 %v381, %v395
        %v402 = vmul.f32 %v386, %v391
        %v403 = vmul.f32 %v386, %v395
        %v404 = vmul.f32 %v364, %v396
        %v405 = vmul.f32 %v360, %v397
        %v406 = vmul.f32 %v365, %v398
        %v407 = vmul.f32 %v361, %v399
        %v408 = vmul.f32 %v366, %v400
        %v409 = vmul.f32 %v362, %v401
        %v410 = vmul.f32 %v367, %v402
        %v411 = vmul.f32 %v363, %v403
        %v412 = vadd.f32 %v404, 0.0
        %v413 = vadd.f32 %v405, 0.0
        %v414 = vadd.f32 %v406, 0.0
        %v415 = vadd.f32 %v407, 0.0
        %v416 = vadd.f32 %v408, 0.0
        %v417 = vadd.f32 %v409, 0.0
        %v418 = vadd.f32 %v410, 0.0
        %v419 = vadd.f32 %v411, 0.0
        %420 = vrot.lane.b32.xlu0 %v311, 16
        %v421 = vpop.permute.xlu0 %420
        %422 = vrot.lane.b32.xlu0 %v317, 16
        %v423 = vpop.permute.xlu0 %422
        %424 = vrot.lane.b32.xlu0 %v323, 16
        %v425 = vpop.permute.xlu0 %424
        %426 = vrot.lane.b32.xlu0 %v329, 16
        %v427 = vpop.permute.xlu0 %426
        %428 = vrot.lane.b32.xlu0 %v313, 16
        %v429 = vpop.permute.xlu0 %428
        %430 = vrot.lane.b32.xlu0 %v319, 16
        %v431 = vpop.permute.xlu0 %430
        %432 = vrot.lane.b32.xlu0 %v325, 16
        %v433 = vpop.permute.xlu0 %432
        %434 = vrot.lane.b32.xlu0 %v331, 16
        %v435 = vpop.permute.xlu0 %434
        %vm436 = vcmp.lt.s32.totalorder %v358, 16
        %v437 = vsel %vm436, %v421, %v429
        %v438 = vsel %vm436, %v423, %v431
        %v439 = vsel %vm436, %v425, %v433
        %v440 = vsel %vm436, %v427, %v435
        %v441 = vsel %vm436, %v429, %v421
        %v442 = vsel %vm436, %v431, %v423
        %v443 = vsel %vm436, %v433, %v425
        %v444 = vsel %vm436, %v435, %v427
        %445 = vset.pattern.permute.xlu0 1
        %446 = vperm.xlu0 %445, %v333
        %v447 = vpop.permute.xlu0 %446
        %449 = vset.pattern.permute.xlu0 1
        %450 = vperm.xlu0 %449, %v334
        %v451 = vpop.permute.xlu0 %450
        %453 = vset.pattern.permute.xlu0 1
        %454 = vperm.xlu0 %453, %v335
        %v455 = vpop.permute.xlu0 %454
        %457 = vset.pattern.permute.xlu0 1
        %458 = vperm.xlu0 %457, %v336
        %v459 = vpop.permute.xlu0 %458
        %v461 = vlaneseq
        %v462 = vshrl.u32 %v461, 7
        %v463 = vsub.s32 1, %v462
        %v464 = vrot.slane %v337, %v463
        %v465 = vlaneseq
        %v466 = vshrl.u32 %v465, 7
        %v467 = vsub.s32 1, %v466
        %v468 = vrot.slane %v338, %v467
        %v469 = vmul.f32 %v447, %v464
        %v470 = vmul.f32 %v447, %v468
        %v471 = vmul.f32 %v451, %v464
        %v472 = vmul.f32 %v451, %v468
        %v473 = vmul.f32 %v455, %v464
        %v474 = vmul.f32 %v455, %v468
        %v475 = vmul.f32 %v459, %v464
        %v476 = vmul.f32 %v459, %v468
        %v477 = vmul.f32 %v441, %v469
        %v478 = vmul.f32 %v437, %v470
        %v479 = vmul.f32 %v442, %v471
        %v480 = vmul.f32 %v438, %v472
        %v481 = vmul.f32 %v443, %v473
        %v482 = vmul.f32 %v439, %v474
        %v483 = vmul.f32 %v444, %v475
        %v484 = vmul.f32 %v440, %v476
        %v485 = vadd.f32 %v412, %v477
        %v486 = vadd.f32 %v413, %v478
        %v487 = vadd.f32 %v414, %v479
        %v488 = vadd.f32 %v415, %v480
        %v489 = vadd.f32 %v416, %v481
        %v490 = vadd.f32 %v417, %v482
        %v491 = vadd.f32 %v418, %v483
        %v492 = vadd.f32 %v419, %v484
        %493 = vrot.lane.b32.xlu0 %v311, 15
        %v494 = vpop.permute.xlu0 %493
        %495 = vrot.lane.b32.xlu0 %v317, 15
        %v496 = vpop.permute.xlu0 %495
        %497 = vrot.lane.b32.xlu0 %v323, 15
        %v498 = vpop.permute.xlu0 %497
        %499 = vrot.lane.b32.xlu0 %v329, 15
        %v500 = vpop.permute.xlu0 %499
        %501 = vrot.lane.b32.xlu0 %v313, 15
        %v502 = vpop.permute.xlu0 %501
        %503 = vrot.lane.b32.xlu0 %v319, 15
        %v504 = vpop.permute.xlu0 %503
        %505 = vrot.lane.b32.xlu0 %v325, 15
        %v506 = vpop.permute.xlu0 %505
        %507 = vrot.lane.b32.xlu0 %v331, 15
        %v508 = vpop.permute.xlu0 %507
        %vm509 = vcmp.lt.s32.totalorder %v358, 15
        %v510 = vsel %vm509, %v494, %v502
        %v511 = vsel %vm509, %v496, %v504
        %v512 = vsel %vm509, %v498, %v506
        %v513 = vsel %vm509, %v500, %v508
        %v514 = vsel %vm509, %v502, %v494
        %v515 = vsel %vm509, %v504, %v496
        %v516 = vsel %vm509, %v506, %v498
        %v517 = vsel %vm509, %v508, %v500
        %518 = vset.pattern.permute.xlu0 2
        %519 = vperm.xlu0 %518, %v333
        %v520 = vpop.permute.xlu0 %519
        %522 = vset.pattern.permute.xlu0 2
        %523 = vperm.xlu0 %522, %v334
        %v524 = vpop.permute.xlu0 %523
        %526 = vset.pattern.permute.xlu0 2
        %527 = vperm.xlu0 %526, %v335
        %v528 = vpop.permute.xlu0 %527
        %530 = vset.pattern.permute.xlu0 2
        %531 = vperm.xlu0 %530, %v336
        %v532 = vpop.permute.xlu0 %531
        %v534 = vlaneseq
        %v535 = vshrl.u32 %v534, 7
        %v536 = vsub.s32 2, %v535
        %v537 = vrot.slane %v337, %v536
        %v538 = vlaneseq
        %v539 = vshrl.u32 %v538, 7
        %v540 = vsub.s32 2, %v539
        %v541 = vrot.slane %v338, %v540
        %v542 = vmul.f32 %v520, %v537
        %v543 = vmul.f32 %v520, %v541
        %v544 = vmul.f32 %v524, %v537
        %v545 = vmul.f32 %v524, %v541
        %v546 = vmul.f32 %v528, %v537
        %v547 = vmul.f32 %v528, %v541
        %v548 = vmul.f32 %v532, %v537
        %v549 = vmul.f32 %v532, %v541
        %v550 = vmul.f32 %v514, %v542
        %v551 = vmul.f32 %v510, %v543
        %v552 = vmul.f32 %v515, %v544
        %v553 = vmul.f32 %v511, %v545
        %v554 = vmul.f32 %v516, %v546
        %v555 = vmul.f32 %v512, %v547
        %v556 = vmul.f32 %v517, %v548
        %v557 = vmul.f32 %v513, %v549
        %v558 = vadd.f32 %v485, %v550
        %v559 = vadd.f32 %v486, %v551
        %v560 = vadd.f32 %v487, %v552
        %v561 = vadd.f32 %v488, %v553
        %v562 = vadd.f32 %v489, %v554
        %v563 = vadd.f32 %v490, %v555
        %v564 = vadd.f32 %v491, %v556
        %v565 = vadd.f32 %v492, %v557
        %566 = vrot.lane.b32.xlu0 %v311, 1
        %v567 = vpop.permute.xlu0 %566
        %568 = vrot.lane.b32.xlu0 %v317, 1
        %v569 = vpop.permute.xlu0 %568
        %570 = vrot.lane.b32.xlu0 %v323, 1
        %v571 = vpop.permute.xlu0 %570
        %572 = vrot.lane.b32.xlu0 %v329, 1
        %v573 = vpop.permute.xlu0 %572
        %574 = vrot.lane.b32.xlu0 %v313, 1
        %v575 = vpop.permute.xlu0 %574
        %576 = vrot.lane.b32.xlu0 %v319, 1
        %v577 = vpop.permute.xlu0 %576
        %578 = vrot.lane.b32.xlu0 %v325, 1
        %v579 = vpop.permute.xlu0 %578
        %580 = vrot.lane.b32.xlu0 %v331, 1
        %v581 = vpop.permute.xlu0 %580
        %vm582 = vcmp.lt.s32.totalorder %v358, 1
        %v583 = vsel %vm582, %v567, %v575
        %v584 = vsel %vm582, %v569, %v577
        %v585 = vsel %vm582, %v571, %v579
        %v586 = vsel %vm582, %v573, %v581
        %v587 = vsel %vm582, %v575, %v567
        %v588 = vsel %vm582, %v577, %v569
        %v589 = vsel %vm582, %v579, %v571
        %v590 = vsel %vm582, %v581, %v573
        %591 = vset.pattern.permute.xlu0 3
        %592 = vperm.xlu0 %591, %v333
        %v593 = vpop.permute.xlu0 %592
        %595 = vset.pattern.permute.xlu0 3
        %596 = vperm.xlu0 %595, %v334
        %v597 = vpop.permute.xlu0 %596
        %599 = vset.pattern.permute.xlu0 3
        %600 = vperm.xlu0 %599, %v335
        %v601 = vpop.permute.xlu0 %600
        %603 = vset.pattern.permute.xlu0 3
        %604 = vperm.xlu0 %603, %v336
        %v605 = vpop.permute.xlu0 %604
        %v607 = vlaneseq
        %v608 = vshrl.u32 %v607, 7
        %v609 = vsub.s32 3, %v608
        %v610 = vrot.slane %v337, %v609
        %v611 = vlaneseq
        %v612 = vshrl.u32 %v611, 7
        %v613 = vsub.s32 3, %v612
        %v614 = vrot.slane %v338, %v613
        %v615 = vmul.f32 %v593, %v610
        %v616 = vmul.f32 %v593, %v614
        %v617 = vmul.f32 %v597, %v610
        %v618 = vmul.f32 %v597, %v614
        %v619 = vmul.f32 %v601, %v610
        %v620 = vmul.f32 %v601, %v614
        %v621 = vmul.f32 %v605, %v610
        %v622 = vmul.f32 %v605, %v614
        %v623 = vmul.f32 %v587, %v615
        %v624 = vmul.f32 %v583, %v616
        %v625 = vmul.f32 %v588, %v617
        %v626 = vmul.f32 %v584, %v618
        %v627 = vmul.f32 %v589, %v619
        %v628 = vmul.f32 %v585, %v620
        %v629 = vmul.f32 %v590, %v621
        %v630 = vmul.f32 %v586, %v622
        %v631 = vadd.f32 %v558, %v623
        %v632 = vadd.f32 %v559, %v624
        %v633 = vadd.f32 %v560, %v625
        %v634 = vadd.f32 %v561, %v626
        %v635 = vadd.f32 %v562, %v627
        %v636 = vadd.f32 %v563, %v628
        %v637 = vadd.f32 %v564, %v629
        %v638 = vadd.f32 %v565, %v630
        %639 = vset.pattern.permute.xlu0 4
        %640 = vperm.xlu0 %639, %v333
        %v641 = vpop.permute.xlu0 %640
        %643 = vset.pattern.permute.xlu0 4
        %644 = vperm.xlu0 %643, %v334
        %v645 = vpop.permute.xlu0 %644
        %647 = vset.pattern.permute.xlu0 4
        %648 = vperm.xlu0 %647, %v335
        %v649 = vpop.permute.xlu0 %648
        %651 = vset.pattern.permute.xlu0 4
        %652 = vperm.xlu0 %651, %v336
        %v653 = vpop.permute.xlu0 %652
        %v655 = vlaneseq
        %v656 = vshrl.u32 %v655, 7
        %v657 = vsub.s32 4, %v656
        %v658 = vrot.slane %v337, %v657
        %v659 = vlaneseq
        %v660 = vshrl.u32 %v659, 7
        %v661 = vsub.s32 4, %v660
        %v662 = vrot.slane %v338, %v661
        %v663 = vmul.f32 %v641, %v658
        %v664 = vmul.f32 %v641, %v662
        %v665 = vmul.f32 %v645, %v658
        %v666 = vmul.f32 %v645, %v662
        %v667 = vmul.f32 %v649, %v658
        %v668 = vmul.f32 %v649, %v662
        %v669 = vmul.f32 %v653, %v658
        %v670 = vmul.f32 %v653, %v662
        %v671 = vmul.f32 %v311, %v663
        %v672 = vmul.f32 %v313, %v664
        %v673 = vmul.f32 %v317, %v665
        %v674 = vmul.f32 %v319, %v666
        %v675 = vmul.f32 %v323, %v667
        %v676 = vmul.f32 %v325, %v668
        %v677 = vmul.f32 %v329, %v669
        %v678 = vmul.f32 %v331, %v670
        %v679 = vadd.f32 %v631, %v671
        %v680 = vadd.f32 %v632, %v672
        %v681 = vadd.f32 %v633, %v673
        %v682 = vadd.f32 %v634, %v674
        %v683 = vadd.f32 %v635, %v675
        %v684 = vadd.f32 %v636, %v676
        %v685 = vadd.f32 %v637, %v677
        %v686 = vadd.f32 %v638, %v678
        %687 = vrot.lane.b32.xlu0 %v311, 127
        %v688 = vpop.permute.xlu0 %687
        %689 = vrot.lane.b32.xlu0 %v317, 127
        %v690 = vpop.permute.xlu0 %689
        %691 = vrot.lane.b32.xlu0 %v323, 127
        %v692 = vpop.permute.xlu0 %691
        %693 = vrot.lane.b32.xlu0 %v329, 127
        %v694 = vpop.permute.xlu0 %693
        %695 = vrot.lane.b32.xlu0 %v313, 127
        %v696 = vpop.permute.xlu0 %695
        %697 = vrot.lane.b32.xlu0 %v319, 127
        %v698 = vpop.permute.xlu0 %697
        %699 = vrot.lane.b32.xlu0 %v325, 127
        %v700 = vpop.permute.xlu0 %699
        %701 = vrot.lane.b32.xlu0 %v331, 127
        %v702 = vpop.permute.xlu0 %701
        %vm703 = vcmp.lt.s32.totalorder %v358, 127
        %v704 = vsel %vm703, %v688, %v696
        %v705 = vsel %vm703, %v690, %v698
        %v706 = vsel %vm703, %v692, %v700
        %v707 = vsel %vm703, %v694, %v702
        %v708 = vsel %vm703, %v696, %v688
        %v709 = vsel %vm703, %v698, %v690
        %v710 = vsel %vm703, %v700, %v692
        %v711 = vsel %vm703, %v702, %v694
        %712 = vset.pattern.permute.xlu0 5
        %713 = vperm.xlu0 %712, %v333
        %v714 = vpop.permute.xlu0 %713
        %716 = vset.pattern.permute.xlu0 5
        %717 = vperm.xlu0 %716, %v334
        %v718 = vpop.permute.xlu0 %717
        %720 = vset.pattern.permute.xlu0 5
        %721 = vperm.xlu0 %720, %v335
        %v722 = vpop.permute.xlu0 %721
        %724 = vset.pattern.permute.xlu0 5
        %725 = vperm.xlu0 %724, %v336
        %v726 = vpop.permute.xlu0 %725
        %v728 = vlaneseq
        %v729 = vshrl.u32 %v728, 7
        %v730 = vsub.s32 5, %v729
        %v731 = vrot.slane %v337, %v730
        %v732 = vlaneseq
        %v733 = vshrl.u32 %v732, 7
        %v734 = vsub.s32 5, %v733
        %v735 = vrot.slane %v338, %v734
        %v736 = vmul.f32 %v714, %v731
        %v737 = vmul.f32 %v714, %v735
        %v738 = vmul.f32 %v718, %v731
        %v739 = vmul.f32 %v718, %v735
        %v740 = vmul.f32 %v722, %v731
        %v741 = vmul.f32 %v722, %v735
        %v742 = vmul.f32 %v726, %v731
        %v743 = vmul.f32 %v726, %v735
        %v744 = vmul.f32 %v704, %v736
        %v745 = vmul.f32 %v708, %v737
        %v746 = vmul.f32 %v705, %v738
        %v747 = vmul.f32 %v709, %v739
        %v748 = vmul.f32 %v706, %v740
        %v749 = vmul.f32 %v710, %v741
        %v750 = vmul.f32 %v707, %v742
        %v751 = vmul.f32 %v711, %v743
        %v752 = vadd.f32 %v679, %v744
        %v753 = vadd.f32 %v680, %v745
        %v754 = vadd.f32 %v681, %v746
        %v755 = vadd.f32 %v682, %v747
        %v756 = vadd.f32 %v683, %v748
        %v757 = vadd.f32 %v684, %v749
        %v758 = vadd.f32 %v685, %v750
        %v759 = vadd.f32 %v686, %v751
        %760 = vrot.lane.b32.xlu0 %v311, 113
        %v761 = vpop.permute.xlu0 %760
        %762 = vrot.lane.b32.xlu0 %v317, 113
        %v763 = vpop.permute.xlu0 %762
        %764 = vrot.lane.b32.xlu0 %v323, 113
        %v765 = vpop.permute.xlu0 %764
        %766 = vrot.lane.b32.xlu0 %v329, 113
        %v767 = vpop.permute.xlu0 %766
        %768 = vrot.lane.b32.xlu0 %v313, 113
        %v769 = vpop.permute.xlu0 %768
        %770 = vrot.lane.b32.xlu0 %v319, 113
        %v771 = vpop.permute.xlu0 %770
        %772 = vrot.lane.b32.xlu0 %v325, 113
        %v773 = vpop.permute.xlu0 %772
        %774 = vrot.lane.b32.xlu0 %v331, 113
        %v775 = vpop.permute.xlu0 %774
        %vm776 = vcmp.lt.s32.totalorder %v358, 113
        %v777 = vsel %vm776, %v761, %v769
        %v778 = vsel %vm776, %v763, %v771
        %v779 = vsel %vm776, %v765, %v773
        %v780 = vsel %vm776, %v767, %v775
        %v781 = vsel %vm776, %v769, %v761
        %v782 = vsel %vm776, %v771, %v763
        %v783 = vsel %vm776, %v773, %v765
        %v784 = vsel %vm776, %v775, %v767
        %785 = vset.pattern.permute.xlu0 6
        %786 = vperm.xlu0 %785, %v333
        %v787 = vpop.permute.xlu0 %786
        %789 = vset.pattern.permute.xlu0 6
        %790 = vperm.xlu0 %789, %v334
        %v791 = vpop.permute.xlu0 %790
        %793 = vset.pattern.permute.xlu0 6
        %794 = vperm.xlu0 %793, %v335
        %v795 = vpop.permute.xlu0 %794
        %797 = vset.pattern.permute.xlu0 6
        %798 = vperm.xlu0 %797, %v336
        %v799 = vpop.permute.xlu0 %798
        %v801 = vlaneseq
        %v802 = vshrl.u32 %v801, 7
        %v803 = vsub.s32 6, %v802
        %v804 = vrot.slane %v337, %v803
        %v805 = vlaneseq
        %v806 = vshrl.u32 %v805, 7
        %v807 = vsub.s32 6, %v806
        %v808 = vrot.slane %v338, %v807
        %v809 = vmul.f32 %v787, %v804
        %v810 = vmul.f32 %v787, %v808
        %v811 = vmul.f32 %v791, %v804
        %v812 = vmul.f32 %v791, %v808
        %v813 = vmul.f32 %v795, %v804
        %v814 = vmul.f32 %v795, %v808
        %v815 = vmul.f32 %v799, %v804
        %v816 = vmul.f32 %v799, %v808
        %v817 = vmul.f32 %v777, %v809
        %v818 = vmul.f32 %v781, %v810
        %v819 = vmul.f32 %v778, %v811
        %v820 = vmul.f32 %v782, %v812
        %v821 = vmul.f32 %v779, %v813
        %v822 = vmul.f32 %v783, %v814
        %v823 = vmul.f32 %v780, %v815
        %v824 = vmul.f32 %v784, %v816
        %v825 = vadd.f32 %v752, %v817
        %v826 = vadd.f32 %v753, %v818
        %v827 = vadd.f32 %v754, %v819
        %v828 = vadd.f32 %v755, %v820
        %v829 = vadd.f32 %v756, %v821
        %v830 = vadd.f32 %v757, %v822
        %v831 = vadd.f32 %v758, %v823
        %v832 = vadd.f32 %v759, %v824
        %833 = vrot.lane.b32.xlu0 %v311, 112
        %v834 = vpop.permute.xlu0 %833
        %835 = vrot.lane.b32.xlu0 %v317, 112
        %v836 = vpop.permute.xlu0 %835
        %837 = vrot.lane.b32.xlu0 %v323, 112
        %v838 = vpop.permute.xlu0 %837
        %839 = vrot.lane.b32.xlu0 %v329, 112
        %v840 = vpop.permute.xlu0 %839
        %841 = vrot.lane.b32.xlu0 %v313, 112
        %v842 = vpop.permute.xlu0 %841
        %843 = vrot.lane.b32.xlu0 %v319, 112
        %v844 = vpop.permute.xlu0 %843
        %845 = vrot.lane.b32.xlu0 %v325, 112
        %v846 = vpop.permute.xlu0 %845
        %847 = vrot.lane.b32.xlu0 %v331, 112
        %v848 = vpop.permute.xlu0 %847
        %vm849 = vcmp.lt.s32.totalorder %v358, 112
        %v850 = vsel %vm849, %v834, %v842
        %v851 = vsel %vm849, %v836, %v844
        %v852 = vsel %vm849, %v838, %v846
        %v853 = vsel %vm849, %v840, %v848
        %v854 = vsel %vm849, %v842, %v834
        %v855 = vsel %vm849, %v844, %v836
        %v856 = vsel %vm849, %v846, %v838
        %v857 = vsel %vm849, %v848, %v840
        %858 = vset.pattern.permute.xlu0 7
        %859 = vperm.xlu0 %858, %v333
        %v860 = vpop.permute.xlu0 %859
        %862 = vset.pattern.permute.xlu0 7
        %863 = vperm.xlu0 %862, %v334
        %v864 = vpop.permute.xlu0 %863
        %866 = vset.pattern.permute.xlu0 7
        %867 = vperm.xlu0 %866, %v335
        %v868 = vpop.permute.xlu0 %867
        %870 = vset.pattern.permute.xlu0 7
        %871 = vperm.xlu0 %870, %v336
        %v872 = vpop.permute.xlu0 %871
        %v874 = vlaneseq
        %v875 = vshrl.u32 %v874, 7
        %v876 = vsub.s32 7, %v875
        %v877 = vrot.slane %v337, %v876
        %v878 = vlaneseq
        %v879 = vshrl.u32 %v878, 7
        %v880 = vsub.s32 7, %v879
        %v881 = vrot.slane %v338, %v880
        %v882 = vmul.f32 %v860, %v877
        %v883 = vmul.f32 %v860, %v881
        %v884 = vmul.f32 %v864, %v877
        %v885 = vmul.f32 %v864, %v881
        %v886 = vmul.f32 %v868, %v877
        %v887 = vmul.f32 %v868, %v881
        %v888 = vmul.f32 %v872, %v877
        %v889 = vmul.f32 %v872, %v881
        %v890 = vmul.f32 %v850, %v882
        %v891 = vmul.f32 %v854, %v883
        %v892 = vmul.f32 %v851, %v884
        %v893 = vmul.f32 %v855, %v885
        %v894 = vmul.f32 %v852, %v886
        %v895 = vmul.f32 %v856, %v887
        %v896 = vmul.f32 %v853, %v888
        %v897 = vmul.f32 %v857, %v889
        %v898 = vadd.f32 %v825, %v890
        %v899 = vadd.f32 %v826, %v891
        %v900 = vadd.f32 %v827, %v892
        %v901 = vadd.f32 %v828, %v893
        %v902 = vadd.f32 %v829, %v894
        %v903 = vadd.f32 %v830, %v895
        %v904 = vadd.f32 %v831, %v896
        %v905 = vadd.f32 %v832, %v897
        %906 = vrot.lane.b32.xlu0 %v311, 111
        %v907 = vpop.permute.xlu0 %906
        %908 = vrot.lane.b32.xlu0 %v317, 111
        %v909 = vpop.permute.xlu0 %908
        %910 = vrot.lane.b32.xlu0 %v323, 111
        %v911 = vpop.permute.xlu0 %910
        %912 = vrot.lane.b32.xlu0 %v329, 111
        %v913 = vpop.permute.xlu0 %912
        %914 = vrot.lane.b32.xlu0 %v313, 111
        %v915 = vpop.permute.xlu0 %914
        %916 = vrot.lane.b32.xlu0 %v319, 111
        %v917 = vpop.permute.xlu0 %916
        %918 = vrot.lane.b32.xlu0 %v325, 111
        %v919 = vpop.permute.xlu0 %918
        %920 = vrot.lane.b32.xlu0 %v331, 111
        %v921 = vpop.permute.xlu0 %920
        %vm922 = vcmp.lt.s32.totalorder %v358, 111
        %v923 = vsel %vm922, %v907, %v915
        %v924 = vsel %vm922, %v909, %v917
        %v925 = vsel %vm922, %v911, %v919
        %v926 = vsel %vm922, %v913, %v921
        %v927 = vsel %vm922, %v915, %v907
        %v928 = vsel %vm922, %v917, %v909
        %v929 = vsel %vm922, %v919, %v911
        %v930 = vsel %vm922, %v921, %v913
        %931 = vset.pattern.permute.xlu0 8
        %932 = vperm.xlu0 %931, %v333
        %v933 = vpop.permute.xlu0 %932
        %935 = vset.pattern.permute.xlu0 8
        %936 = vperm.xlu0 %935, %v334
        %v937 = vpop.permute.xlu0 %936
        %939 = vset.pattern.permute.xlu0 8
        %940 = vperm.xlu0 %939, %v335
        %v941 = vpop.permute.xlu0 %940
        %943 = vset.pattern.permute.xlu0 8
        %944 = vperm.xlu0 %943, %v336
        %v945 = vpop.permute.xlu0 %944
        %v947 = vlaneseq
        %v948 = vshrl.u32 %v947, 7
        %v949 = vsub.s32 0, %v948
        %v950 = vrot.slane %v339, %v949
        %v951 = vlaneseq
        %v952 = vshrl.u32 %v951, 7
        %v953 = vsub.s32 0, %v952
        %v954 = vrot.slane %v340, %v953
        %v955 = vmul.f32 %v933, %v950
        %v956 = vmul.f32 %v933, %v954
        %v957 = vmul.f32 %v937, %v950
        %v958 = vmul.f32 %v937, %v954
        %v959 = vmul.f32 %v941, %v950
        %v960 = vmul.f32 %v941, %v954
        %v961 = vmul.f32 %v945, %v950
        %v962 = vmul.f32 %v945, %v954
        %v963 = vmul.f32 %v923, %v955
        %v964 = vmul.f32 %v927, %v956
        %v965 = vmul.f32 %v924, %v957
        %v966 = vmul.f32 %v928, %v958
        %v967 = vmul.f32 %v925, %v959
        %v968 = vmul.f32 %v929, %v960
        %v969 = vmul.f32 %v926, %v961
        %v970 = vmul.f32 %v930, %v962
        %v971 = vadd.f32 %v898, %v963
        %v972 = vadd.f32 %v899, %v964
        %v973 = vadd.f32 %v900, %v965
        %v974 = vadd.f32 %v901, %v966
        %v975 = vadd.f32 %v902, %v967
        %v976 = vadd.f32 %v903, %v968
        %v977 = vadd.f32 %v904, %v969
        %v978 = vadd.f32 %v905, %v970
        %v979 = vld [vmem:[%s3] sm:$0xff]
        %v980 = vld [vmem:[%s3 + $0x8] sm:$0xff]
        %v981 = vld [vmem:[%s3 + $0x10] sm:$0xff]
        %v982 = vld [vmem:[%s3 + $0x18] sm:$0xff]
        %984 = vset.pattern.permute.xlu0 0
        %985 = vperm.xlu0 %984, %v979
        %v986 = vpop.permute.xlu0 %985
        %989 = vset.pattern.permute.xlu0 0
        %990 = vperm.xlu0 %989, %v980
        %v991 = vpop.permute.xlu0 %990
        %994 = vset.pattern.permute.xlu0 0
        %995 = vperm.xlu0 %994, %v981
        %v996 = vpop.permute.xlu0 %995
        %999 = vset.pattern.permute.xlu0 0
        %1000 = vperm.xlu0 %999, %v982
        %v1001 = vpop.permute.xlu0 %1000
        %v1003 = vadd.f32 %v971, %v986
        %v1004 = vadd.f32 %v972, %v986
        %v1005 = vadd.f32 %v973, %v991
        %v1006 = vadd.f32 %v974, %v991
        %v1007 = vadd.f32 %v975, %v996
        %v1008 = vadd.f32 %v976, %v996
        %v1009 = vadd.f32 %v977, %v1001
        %v1010 = vadd.f32 %v978, %v1001
        %v1011 = vmax.f32 %v1003, 0.0
        %v1012 = vmax.f32 %v1004, 0.0
        %v1013 = vmax.f32 %v1005, 0.0
        %v1014 = vmax.f32 %v1006, 0.0
        %v1015 = vmax.f32 %v1007, 0.0
        %v1016 = vmax.f32 %v1008, 0.0
        %v1017 = vmax.f32 %v1009, 0.0
        %v1018 = vmax.f32 %v1010, 0.0
        %1019 = vst [vmem:[%s217] sm:$0xff] %v1011
        %1020 = vst [vmem:[%s217 + $0x8] sm:$0xff] %v1012
        %1021 = vst [vmem:[%s217 + $0x10] sm:$0xff] %v1013
        %1022 = vst [vmem:[%s217 + $0x18] sm:$0xff] %v1014
        %1023 = vst [vmem:[%s217 + $0x20] sm:$0xff] %v1015
        %1024 = vst [vmem:[%s217 + $0x28] sm:$0xff] %v1016
        %1025 = vst [vmem:[%s217 + $0x30] sm:$0xff] %v1017
        %1026 = vst [vmem:[%s217 + $0x38] sm:$0xff] %v1018
        %s1027 = sand.u32 %s137, 1
        %s1028 = scalar_lea.sflag [#allocation3], %s1027
        %s1029 = sand.u32 %s137, 1
        %s1030 = smul.addr %s1029, 64
        %s1031 = scalar_lea.vmem [#allocation2], %s1030
        // Predicated region
        $region41: #{tpu_custom_call.1} parent=39 // pred_check
          %p1032 = pneg %p147
        $region42: #{tpu_custom_call.1} parent=39 // pred_check_branch
          %1034 = sbr.rel (%p1032) target = $region44
        $region43: #{tpu_custom_call.1} parent=39 // pred_region
          %s1036 = ssub.s32 1024, 1024
          %1037 = vsyncadd %s1028, %s1036
          %s1038 = smul.addr %s19, 8
          %s1039 = smul.addr %s1038, 128
          %s1040 = scalar_lea.hbm %s5, %s1039
          %s1041 = sshll.u32 %s1031, 4
          %s1042 = int_to_ptr.vmem [resolvable:$true] %s1041
          %1047 = dma.vmem_to_hbm [thread:$0]  %s1042, 1024, %s1040, %s1028, 256, 256, 16
        $region44: #{tpu_custom_call.1} parent=39 // pred_fallthru
          _
      $region40: #{tpu_custom_call.1} parent=5 // pred_fallthru
        _
      %p1048 = scmp.le.s32.totalorder 2, %s14
      // Predicated region
      $region45: #{tpu_custom_call.1} parent=5 // pred_check
        %p1049 = pneg %p1048
      $region46: #{tpu_custom_call.1} parent=5 // pred_check_branch
        %1051 = sbr.rel (%p1049) target = $region48
      $region47: #{tpu_custom_call.1} parent=5 // pred_region
        %s1052 = ssub.s32 %s14, 2
        // Predicated region
        $region49: #{tpu_custom_call.1} parent=47 // pred_check
          %p1053 = pneg %p153
        $region50: #{tpu_custom_call.1} parent=47 // pred_check_branch
          %1055 = sbr.rel (%p1053) target = $region52
        $region51: #{tpu_custom_call.1} parent=47 // pred_region
          %s1056 = sand.u32 %s138, 1
          %s1057 = scalar_lea.sflag [#allocation3], %s1056
          %s1058 = sand.u32 %s138, 1
          %s1059 = smul.addr %s1058, 64
          %s1060 = scalar_lea.vmem [#allocation2], %s1059
          %1061 = dma.done %s1057, 1024
        $region52: #{tpu_custom_call.1} parent=47 // pred_fallthru
          _
      $region48: #{tpu_custom_call.1} parent=5 // pred_fallthru
        _
    $region6: #{tpu_custom_call.1} parent=1 // loop_footer
      %s18 = sadd.s32 1, %s14
    $region7: #{tpu_custom_call.1} parent=1 // loop_footer_branch
      %13 = sbr.rel target = $region3
    $region8: #{tpu_custom_call.1} parent=1 // loop_exit
      _
    %1062 = vsyncpa [#allocation3], 1
    %s1063 = scalar_lea.sflag [#allocation3], 1
    %1064 = vsyncpa %s1063, 1

</llo_original>
